<compile_context>
chip_gen: v7x
topology: tpu7x:2x2x1
jax: 0.10.0
libtpu: 0.0.40
codegen_flags: <defaults>
</compile_context>

<pallas_src>
import jax
import jax.numpy as jnp
from jax.experimental import pallas as pl
from jax.experimental.pallas import tpu as pltpu

_LANE = 128
_SUBLANE = 8


def _identity_copy_kernel(x_ref, o_ref):
    # Pure tile passthrough: DMA in, DMA out.  No VMEM relayout, no compute.
    o_ref[...] = x_ref[...]


def store_video_frames_forward(x: jax.Array) -> jax.Array:
    """Pallas equivalent of StoreVideoFrames(...)(x): returns x (identity).

    The video-file side effect of the original module is not translatable to a
    TPU kernel and is intentionally omitted.
    """
    # TODO(synk): host-side MP4 writing (Path.mkdir / imageio.mimsave) and the
    # einops rearrange feeding it have no Pallas equivalent; only the returned
    # value (x itself) is implemented on-device.
    orig_shape = x.shape
    n = x.size

    # Flatten to a lane-dense 2-D slab.  Pad so rows is a multiple of
    # 2 * sublane (= 16): this guarantees we can always split into >= 2
    # grid steps whose row count is a multiple of 8 (unmasked stores).
    flat = x.reshape(-1)
    pad = (-n) % (2 * _SUBLANE * _LANE)
    if pad:
        flat = jnp.pad(flat, (0, pad))
    rows = flat.size // _LANE
    x2d = flat.reshape(rows, _LANE)

    # Block sizing: start at rows // 2 (>= 2 grid steps, multiple of 8) and
    # halve toward ~1 MiB per block while preserving divisibility and the
    # 8-sublane alignment.
    itemsize = jnp.dtype(x.dtype).itemsize
    target_rows = max(_SUBLANE, (1 << 20) // (_LANE * itemsize))  # ~1 MiB/block
    bt = rows // 2
    while bt > target_rows and bt % 2 == 0 and (bt // 2) % _SUBLANE == 0:
        bt //= 2
    grid = rows // bt

    out2d = pl.pallas_call(
        _identity_copy_kernel,
        out_shape=jax.ShapeDtypeStruct((rows, _LANE), x2d.dtype),
        grid_spec=pltpu.PrefetchScalarGridSpec(
            num_scalar_prefetch=0,
            grid=(grid,),
            in_specs=[pl.BlockSpec((bt, _LANE), lambda i: (i, 0))],
            out_specs=pl.BlockSpec((bt, _LANE), lambda i: (i, 0)),
        ),
        compiler_params=pltpu.CompilerParams(
            dimension_semantics=("parallel",),
        ),
    )(x2d)

    return out2d.reshape(-1)[:n].reshape(orig_shape)


if __name__ == "__main__":
    key = jax.random.PRNGKey(0)

    # Shapes implied by the module: x is '(b l) c h w' frames.
    B, L, C, H, W = 2, 4, 4, 16, 16
    x = jax.random.uniform(
        key, (B * L, C, H, W), dtype=jnp.float32, minval=0.0, maxval=255.0
    )

    out = store_video_frames_forward(x)
    out = jax.block_until_ready(out)

    # forward(x) must return x unchanged.
    assert out.shape == x.shape
    assert out.dtype == x.dtype
    assert jnp.array_equal(out, x)

    print("KERNEL_OK")
</pallas_src>

<mosaic_0001>
module attributes {stable_mosaic.version = 11 : i64} {
  func.func @_identity_copy_kernel(%arg0: i32, %arg1: memref<32x128xf32, #tpu.memory_space<vmem>>, %arg2: memref<32x128xf32, #tpu.memory_space<vmem>>) attributes {dimension_semantics = [#tpu.dimension_semantics<parallel>], iteration_bounds = array<i64: 2>, scalar_prefetch = 0 : i64, scratch_operands = 0 : i64, tpu.core_type = #tpu.core_type<tc>, window_params = [{transform_indices = @transform_0, window_bounds = array<i64: 32, 128>}, {transform_indices = @transform_1, window_bounds = array<i64: 32, 128>}]} {
    %c0 = arith.constant 0 : index
    %c0_0 = arith.constant 0 : index
    %0 = vector.load %arg1[%c0, %c0_0] : memref<32x128xf32, #tpu.memory_space<vmem>>, vector<32x128xf32>
    %c0_1 = arith.constant 0 : index
    %c0_2 = arith.constant 0 : index
    %1 = vector.load %arg2[%c0_1, %c0_2] : memref<32x128xf32, #tpu.memory_space<vmem>>, vector<32x128xf32>
    tpu.vector_store %arg2[%c0_1, %c0_2], %0 {strides = array<i32>} : memref<32x128xf32, #tpu.memory_space<vmem>>, vector<32x128xf32>,
    return
  }
  func.func @transform_0(%arg0: i32) -> (i32, i32) {
    %c0_i32 = arith.constant 0 : i32
    %c0_i32_0 = arith.constant 0 : i32
    return %arg0, %c0_i32 : i32, i32
  }
  func.func @transform_1(%arg0: i32) -> (i32, i32) {
    %c0_i32 = arith.constant 0 : i32
    %c0_i32_0 = arith.constant 0 : i32
    return %arg0, %c0_i32 : i32, i32
  }
}

</mosaic_0001>

<llo_original>
// kernel: tpu_custom_call.1
$region0: #{tpu_custom_call.1}
  #allocation0 [shape = 'u32[]', space=smem, size = 0x4, offset = 0x4, fixed_abs, tag = 'smem constant byte address 0x4 - core index']
  #allocation1 [shape = 'u32[144,128]{1,0:T(1,128)}', space=vmem, size = 0x12000, scoped, tag = 'internal scratch']
  %s0 = inlined_call_operand.hbm [shape: f32[64,128], index: 0, kind: input, shape index: {}]
  %s1 = inlined_call_operand.hbm [shape: f32[64,128], index: 1, kind: output, shape index: {}]
  %s2 = sld [smem:[#allocation0]]
  $region41: #{tpu_custom_call.1} parent=0
    _
  %s4 = ssub.s32 1, %s2
  %s5 = scalar_select 0, %s4, %s2
  $region1: #{tpu_custom_call.1} parent=0
    #allocation2 [shape = 'u8[32768]{0}', space=vmem, size = 0x8000, scoped, tag = 'input window, operand 0']
    #allocation3 [shape = 's32[2]{0}', space=sflag, size = 0x8, scoped, tag = 'scoped memory for tpu_custom_call.1']
    #allocation4 [shape = 's32[2]{0}', space=sflag, size = 0x8, scoped, tag = 'scoped memory for tpu_custom_call.1']
    #allocation5 [shape = 'u8[32768]{0}', space=vmem, size = 0x8000, scoped, tag = 'output window, operand 0']
    %6 = vsyncpa [#allocation3], 0
    %s7 = scalar_lea.sflag [#allocation3], 1
    %8 = vsyncpa %s7, 0
    %9 = vsyncpa [#allocation4], 0
    %s10 = scalar_lea.sflag [#allocation4], 1
    %11 = vsyncpa %s10, 0
    loop: start=0, step=1, limit=4
    $region2: #{tpu_custom_call.1} parent=1 // loop_pre_header
      _
    $region3: #{tpu_custom_call.1} parent=1 // loop_header
      %s13 = sphi 0, %s17
      %p14 = scmp.ge.s32.totalorder %s13, 4
      %s23 = sphi 0, %s25
      %s26 = sphi 0, %s23
      %s27 = sphi 0, %s26
      %s43 = sphi 0, %s27
      %s49 = sphi 0, %s51
      %s52 = sphi 0, %s49
      %s53 = sphi 0, %s52
      %s69 = sphi 0, %s53
    $region4: #{tpu_custom_call.1} parent=1 // loop_header_branch
      %16 = sbr.rel (%p14) target = $region8
    $region5: #{tpu_custom_call.1} parent=1 // loop_body
      %s18 = ssub.s32 %s13, 1
      %s19 = ssub.s32 %s13, 2
      %s20 = sadd.s32 %s13, 1
      %s21 = ssub.s32 %s13, %s20
      %p22 = scmp.eq.s32.totalorder %s21, 0
      %s24 = sadd.s32 %s23, 1
      %s25 = scalar_select %p22, %s23, %s24
      %p28 = pneg %p22
      %p29 = scmp.eq.s32.totalorder %s13, 1
      %p30 = por %p28, %p29
      %p31 = scmp.ne.s32.totalorder %s23, %s26
      %p32 = scmp.eq.s32.totalorder %s13, 0
      %p33 = por %p31, %p32
      %p34 = scmp.ne.s32.totalorder %s23, %s26
      %p35 = scmp.eq.s32.totalorder %s18, 1
      %p36 = por %p34, %p35
      %p37 = scmp.ne.s32.totalorder %s26, %s27
      %p38 = scmp.eq.s32.totalorder %s18, 0
      %p39 = por %p37, %p38
      %p40 = scmp.ne.s32.totalorder %s26, %s27
      %p41 = scmp.eq.s32.totalorder %s19, 1
      %p42 = por %p40, %p41
      %p44 = scmp.ne.s32.totalorder %s27, %s43
      %p45 = scmp.eq.s32.totalorder %s19, 0
      %p46 = por %p44, %p45
      %s47 = ssub.s32 %s13, %s20
      %p48 = scmp.eq.s32.totalorder %s47, 0
      %s50 = sadd.s32 %s49, 1
      %s51 = scalar_select %p48, %s49, %s50
      %p54 = pneg %p48
      %p55 = scmp.eq.s32.totalorder %s13, 1
      %p56 = por %p54, %p55
      %p57 = scmp.ne.s32.totalorder %s49, %s52
      %p58 = scmp.eq.s32.totalorder %s13, 0
      %p59 = por %p57, %p58
      %p60 = scmp.ne.s32.totalorder %s49, %s52
      %p61 = scmp.eq.s32.totalorder %s18, 1
      %p62 = por %p60, %p61
      %p63 = scmp.ne.s32.totalorder %s52, %s53
      %p64 = scmp.eq.s32.totalorder %s18, 0
      %p65 = por %p63, %p64
      %p66 = scmp.ne.s32.totalorder %s52, %s53
      %p67 = scmp.eq.s32.totalorder %s19, 1
      %p68 = por %p66, %p67
      %p70 = scmp.ne.s32.totalorder %s53, %s69
      %p71 = scmp.eq.s32.totalorder %s19, 0
      %p72 = por %p70, %p71
      %p73 = scmp.le.s32.totalorder 1, %s13
      %p74 = scmp.lt.s32.totalorder %s13, 3
      %p75 = pnand %p73, %p74
      %p76 = pneg %p75
      // Predicated region
      $region9: #{tpu_custom_call.1} parent=5 // pred_check
        _
      $region10: #{tpu_custom_call.1} parent=5 // pred_check_branch
        %78 = sbr.rel (%p75) target = $region12
      $region11: #{tpu_custom_call.1} parent=5 // pred_region
        %s79 = ssub.s32 %s13, 1
      $region12: #{tpu_custom_call.1} parent=5 // pred_fallthru
        _
      %p80 = scmp.lt.s32.totalorder %s13, 2
      // Predicated region
      $region13: #{tpu_custom_call.1} parent=5 // pred_check
        %p81 = pneg %p80
      $region14: #{tpu_custom_call.1} parent=5 // pred_check_branch
        %83 = sbr.rel (%p81) target = $region16
      $region15: #{tpu_custom_call.1} parent=5 // pred_region
        // Predicated region
        $region17: #{tpu_custom_call.1} parent=15 // pred_check
          %p84 = pneg %p33
        $region18: #{tpu_custom_call.1} parent=15 // pred_check_branch
          %86 = sbr.rel (%p84) target = $region20
        $region19: #{tpu_custom_call.1} parent=15 // pred_region
          %s87 = sand.u32 %s23, 1
          %s88 = scalar_lea.sflag [#allocation3], %s87
          %s89 = sand.u32 %s23, 1
          %s90 = smul.addr %s89, 32
          %s91 = scalar_lea.vmem [#allocation2], %s90
          %s92 = smul.u32 4, %s13
          %s94 = ssub.s32 512, 512
          %95 = vsyncadd %s88, %s94
          %s96 = smul.addr %s92, 128
          %s97 = scalar_lea.hbm %s0, %s96
          %s98 = sshll.u32 %s91, 4
          %s99 = int_to_ptr.vmem [resolvable:$true] %s98
          %104 = dma.hbm_to_vmem [thread:$0]  %s97, 512, %s99, %s88, 128, 128, 8
        $region20: #{tpu_custom_call.1} parent=15 // pred_fallthru
          _
      $region16: #{tpu_custom_call.1} parent=5 // pred_fallthru
        _
      %p105 = scmp.le.s32.totalorder 1, %s13
      %p106 = scmp.lt.s32.totalorder %s13, 3
      %p107 = pnand %p105, %p106
      %p108 = pneg %p107
      // Predicated region
      $region21: #{tpu_custom_call.1} parent=5 // pred_check
        _
      $region22: #{tpu_custom_call.1} parent=5 // pred_check_branch
        %110 = sbr.rel (%p107) target = $region24
      $region23: #{tpu_custom_call.1} parent=5 // pred_region
        %s111 = ssub.s32 %s13, 1
        %s112 = sand.u32 %s26, 1
        %s113 = scalar_lea.sflag [#allocation3], %s112
        %s114 = sand.u32 %s26, 1
        %s115 = smul.addr %s114, 32
        %s116 = scalar_lea.vmem [#allocation2], %s115
        // Predicated region
        $region25: #{tpu_custom_call.1} parent=23 // pred_check
          %p117 = pneg %p39
        $region26: #{tpu_custom_call.1} parent=23 // pred_check_branch
          %119 = sbr.rel (%p117) target = $region28
        $region27: #{tpu_custom_call.1} parent=23 // pred_region
          %120 = dma.done %s113, 512
        $region28: #{tpu_custom_call.1} parent=23 // pred_fallthru
          _
        %s121 = sand.u32 %s26, 1
        %s122 = scalar_lea.sflag [#allocation3], %s121
        %s123 = sand.u32 %s26, 1
        %s124 = smul.addr %s123, 32
        %s125 = scalar_lea.vmem [#allocation2], %s124
        %p126 = pneg %p39
        %p127 = pneg %p36
        %p128 = pneg %p65
        %p129 = pneg %p62
        %s130 = sand.u32 %s52, 1
        %s131 = scalar_lea.sflag [#allocation4], %s130
        %s132 = sand.u32 %s52, 1
        %s133 = smul.addr %s132, 32
        %s134 = scalar_lea.vmem [#allocation5], %s133
        %s135 = smul.u32 4, %s18
        %s136 = smul.u32 4, %s18
        %v137 = vld [vmem:[%s116] sm:$0xff]
        %v138 = vld [vmem:[%s116 + $0x8] sm:$0xff]
        %v139 = vld [vmem:[%s116 + $0x10] sm:$0xff]
        %v140 = vld [vmem:[%s116 + $0x18] sm:$0xff]
        %141 = vst [vmem:[%s134] sm:$0xff] %v137
        %142 = vst [vmem:[%s134 + $0x8] sm:$0xff] %v138
        %143 = vst [vmem:[%s134 + $0x10] sm:$0xff] %v139
        %144 = vst [vmem:[%s134 + $0x18] sm:$0xff] %v140
        %s145 = sand.u32 %s52, 1
        %s146 = scalar_lea.sflag [#allocation4], %s145
        %s147 = sand.u32 %s52, 1
        %s148 = smul.addr %s147, 32
        %s149 = scalar_lea.vmem [#allocation5], %s148
        // Predicated region
        $region29: #{tpu_custom_call.1} parent=23 // pred_check
          %p150 = pneg %p62
        $region30: #{tpu_custom_call.1} parent=23 // pred_check_branch
          %152 = sbr.rel (%p150) target = $region32
        $region31: #{tpu_custom_call.1} parent=23 // pred_region
          %s153 = smul.u32 4, %s18
          %s155 = ssub.s32 512, 512
          %156 = vsyncadd %s146, %s155
          %s157 = smul.addr %s153, 128
          %s158 = scalar_lea.hbm %s1, %s157
          %s159 = sshll.u32 %s149, 4
          %s160 = int_to_ptr.vmem [resolvable:$true] %s159
          %165 = dma.vmem_to_hbm [thread:$0]  %s160, 512, %s158, %s146, 128, 128, 8
        $region32: #{tpu_custom_call.1} parent=23 // pred_fallthru
          _
      $region24: #{tpu_custom_call.1} parent=5 // pred_fallthru
        _
      %p166 = scmp.le.s32.totalorder 2, %s13
      // Predicated region
      $region33: #{tpu_custom_call.1} parent=5 // pred_check
        %p167 = pneg %p166
      $region34: #{tpu_custom_call.1} parent=5 // pred_check_branch
        %169 = sbr.rel (%p167) target = $region36
      $region35: #{tpu_custom_call.1} parent=5 // pred_region
        %s170 = ssub.s32 %s13, 2
        // Predicated region
        $region37: #{tpu_custom_call.1} parent=35 // pred_check
          %p171 = pneg %p68
        $region38: #{tpu_custom_call.1} parent=35 // pred_check_branch
          %173 = sbr.rel (%p171) target = $region40
        $region39: #{tpu_custom_call.1} parent=35 // pred_region
          %s174 = sand.u32 %s53, 1
          %s175 = scalar_lea.sflag [#allocation4], %s174
          %s176 = sand.u32 %s53, 1
          %s177 = smul.addr %s176, 32
          %s178 = scalar_lea.vmem [#allocation5], %s177
          %179 = dma.done %s175, 512
        $region40: #{tpu_custom_call.1} parent=35 // pred_fallthru
          _
      $region36: #{tpu_custom_call.1} parent=5 // pred_fallthru
        _
    $region6: #{tpu_custom_call.1} parent=1 // loop_footer
      %s17 = sadd.s32 1, %s13
    $region7: #{tpu_custom_call.1} parent=1 // loop_footer_branch
      %12 = sbr.rel target = $region3
    $region8: #{tpu_custom_call.1} parent=1 // loop_exit
      _
    %180 = vsyncpa [#allocation3], 1
    %s181 = scalar_lea.sflag [#allocation3], 1
    %182 = vsyncpa %s181, 1
    %183 = vsyncpa [#allocation4], 1
    %s184 = scalar_lea.sflag [#allocation4], 1
    %185 = vsyncpa %s184, 1

</llo_original>
